<compile_context>
chip_gen: v7x
topology: tpu7x:2x2x1
jax: 0.10.0
libtpu: 0.0.40
codegen_flags: <defaults>
</compile_context>

<pallas_src>
import functools

import numpy as np
import jax
import jax.numpy as jnp
from jax.experimental import pallas as pl
from jax.experimental.pallas import tpu as pltpu


def _round_up(x, m):
    return (x + m - 1) // m * m


def _vmem_budget_bytes():
    """Scoped-VMEM budget appropriate for the TPU generation (safe fallback)."""
    try:
        kind = jax.devices()[0].device_kind.lower()
    except Exception:
        kind = ""
    if "v7" in kind:                 # 64 MiB physical / 32 MiB scoped default
        return 32 * 1024 * 1024
    if "v5" in kind or "v6" in kind:  # 128 MiB physical -> allow bigger tiles
        return 96 * 1024 * 1024
    return 32 * 1024 * 1024           # unknown chip: conservative, safe everywhere


def _temp_scale_linear_kernel(x_ref, w_ref, b_ref, t_ref, o_ref, *, compute_dtype):
    """One (tm, F) @ (F, K_pad) tile: out = (x @ w + b) * (1 / temperature)."""
    # Scalar reciprocal once per grid step (SMEM read) + one broadcast multiply
    # in the epilogue instead of a multi-pass vector divide.
    inv_t = 1.0 / t_ref[0]
    # Per-tile cast to the MXU dtype (free VPU work under the x DMA); the
    # dominant x stream stays in its stored dtype in HBM.
    x = x_ref[...].astype(compute_dtype)
    logits = jnp.dot(x, w_ref[...], preferred_element_type=jnp.float32)
    o_ref[...] = (logits + b_ref[...]) * inv_t


def model_with_temperature_forward(x_nchw, w, b, temperature, *,
                                   compute_dtype=jnp.bfloat16, tm_max=2048):
    """
    x_nchw:      (N, C, H, W)  -- NCHW input, flattened to (N, F = C*H*W)
    w:           (F, K)        -- synthetic classifier weight
    b:           (K,)          -- synthetic classifier bias
    temperature: scalar / (1,) -- nn.Parameter(torch.ones(1) * 1.5)
    returns:     (N, K) float32 temperature-scaled logits
    """
    N = x_nchw.shape[0]
    K = w.shape[1]

    # Flatten NCHW -> (N, F).  No dtype cast and no batch pad here: both would
    # be an extra full HBM read+write of the bandwidth-dominant x stream.
    x2d = x_nchw.reshape(N, -1)
    F = x2d.shape[1]

    # Small resident operands: cast / pad once outside the hot loop (K << F).
    K_pad = _round_up(max(K, 128), 128)           # lane-dense output (unmasked vst)
    w2d = w.astype(compute_dtype)
    b1d = b.astype(jnp.float32)
    if K_pad != K:
        w2d = jnp.pad(w2d, ((0, 0), (0, K_pad - K)))
        b1d = jnp.pad(b1d, (0, K_pad - K))
    b2d = b1d.reshape(1, K_pad)
    t1d = jnp.asarray(temperature, jnp.float32).reshape(1)

    # ---- F-aware batch tile ------------------------------------------------
    vmem_budget = _vmem_budget_bytes()
    x_itemsize = np.dtype(x2d.dtype).itemsize
    w_itemsize = np.dtype(compute_dtype).itemsize
    # Per batch row: double-buffered x tile + double-buffered f32 output tile.
    per_row = 2 * F * x_itemsize + 2 * K_pad * 4
    # Resident (pipeliner may still double-buffer): weight + bias.
    resident = 2 * F * K_pad * w_itemsize + 2 * K_pad * 4
    avail = int(vmem_budget * 0.75) - resident
    tm_fit = max(16, (avail // per_row) // 16 * 16) if avail > per_row * 16 else 16
    # Keep >= ~4 grid steps when the batch allows it (2 TCs on v7x + pipelining).
    tm_split = max(16, _round_up(pl.cdiv(N, 4), 16))

    if N <= 16:
        tm = N                      # single block; batch dim equals full array dim
    else:
        tm = int(max(16, min(tm_max, tm_fit, tm_split)))
    grid = (pl.cdiv(N, tm),)

    kernel = functools.partial(_temp_scale_linear_kernel, compute_dtype=compute_dtype)

    grid_spec = pltpu.PrefetchScalarGridSpec(
        num_scalar_prefetch=0,
        grid=grid,
        in_specs=[
            pl.BlockSpec((tm, F), lambda i: (i, 0)),             # x tile (pipelined, stored dtype)
            pl.BlockSpec((F, K_pad), lambda i: (0, 0)),          # weight (resident)
            pl.BlockSpec((1, K_pad), lambda i: (0, 0)),          # bias   (resident)
            pl.BlockSpec(memory_space=pltpu.MemorySpace.SMEM),   # temperature scalar
        ],
        out_specs=pl.BlockSpec((tm, K_pad), lambda i: (i, 0)),
    )

    out = pl.pallas_call(
        kernel,
        out_shape=jax.ShapeDtypeStruct((N, K_pad), jnp.float32),
        grid_spec=grid_spec,
        compiler_params=pltpu.CompilerParams(
            dimension_semantics=("parallel",),   # shard batch tiles across TCs
            vmem_limit_bytes=vmem_budget,
        ),
    )(x2d, w2d, b2d, t1d)

    return out if K_pad == K else out[:, :K]


if __name__ == "__main__":
    # Small deterministic shapes consistent with the module's forward:
    # NCHW image input -> classifier logits -> temperature scaling.
    N, C, H, W = 2, 4, 16, 16
    K = 10  # number of classes
    F = C * H * W

    key = jax.random.PRNGKey(0)
    kx, kw, kb = jax.random.split(key, 3)

    x = jax.random.normal(kx, (N, C, H, W), dtype=jnp.float32)
    w = jax.random.normal(kw, (F, K), dtype=jnp.float32) * 0.02
    b = jax.random.normal(kb, (K,), dtype=jnp.float32) * 0.1
    # nn.Parameter(torch.ones(1) * 1.5) in __init__:
    temperature = jnp.ones((1,), dtype=jnp.float32) * 1.5

    out = jax.block_until_ready(model_with_temperature_forward(x, w, b, temperature))

    # Reference with the same bf16-quantized MXU operands and f32 accumulation
    # (identical math to the kernel's in-kernel-cast bf16 / f32-accum MXU path).
    xq = x.reshape(N, -1).astype(jnp.bfloat16)
    wq = w.astype(jnp.bfloat16)
    ref = (jnp.dot(xq, wq, preferred_element_type=jnp.float32) + b) / temperature[0]

    assert out.shape == (N, K)
    assert jnp.allclose(out, ref, atol=2e-2, rtol=2e-2), float(jnp.max(jnp.abs(out - ref)))

    print("KERNEL_OK")
</pallas_src>

<mosaic_0001>
module attributes {stable_mosaic.version = 11 : i64} {
  func.func @_temp_scale_linear_kernel(%arg0: i32, %arg1: memref<2x1024xf32, #tpu.memory_space<vmem>>, %arg2: memref<1024x128xbf16, #tpu.memory_space<vmem>>, %arg3: memref<1x128xf32, #tpu.memory_space<vmem>>, %arg4: memref<1xf32, #tpu.memory_space<smem>>, %arg5: memref<2x128xf32, #tpu.memory_space<vmem>>) attributes {dimension_semantics = [#tpu.dimension_semantics<parallel>], iteration_bounds = array<i64: 1>, scalar_prefetch = 0 : i64, scratch_operands = 0 : i64, tpu.core_type = #tpu.core_type<tc>, window_params = [{transform_indices = @transform_0, window_bounds = array<i64: 2, 1024>}, {pipeline_mode = #tpu.pipeline_mode<synchronous>, transform_indices = @transform_1, window_bounds = array<i64: 1024, 128>}, {pipeline_mode = #tpu.pipeline_mode<synchronous>, transform_indices = @transform_2, window_bounds = array<i64: 1, 128>}, {transform_indices = @transform_3, window_bounds = array<i64: 1>}, {transform_indices = @transform_4, window_bounds = array<i64: 2, 128>}]} {
    %c0 = arith.constant 0 : index
    %0 = memref.load %arg4[%c0] : memref<1xf32, #tpu.memory_space<smem>>
    %cst = arith.constant 1.000000e+00 : f32
    %1 = arith.divf %cst, %0 : f32
    %c0_0 = arith.constant 0 : index
    %c0_1 = arith.constant 0 : index
    %2 = vector.load %arg1[%c0_0, %c0_1] : memref<2x1024xf32, #tpu.memory_space<vmem>>, vector<2x1024xf32>
    %3 = arith.truncf %2 : vector<2x1024xf32> to vector<2x1024xbf16>
    %c0_2 = arith.constant 0 : index
    %c0_3 = arith.constant 0 : index
    %4 = vector.load %arg2[%c0_2, %c0_3] : memref<1024x128xbf16, #tpu.memory_space<vmem>>, vector<1024x128xbf16>
    %cst_4 = arith.constant dense<0.000000e+00> : vector<2x128xf32>
    %5 = tpu.matmul %3, %4, %cst_4 {dimension_numbers = #tpu.dot_dimension_numbers<[1], [0], [0], [1], [0, 0, 1, 1], [], []>} : vector<2x1024xbf16>, vector<1024x128xbf16>, vector<2x128xf32> -> vector<2x128xf32>
    %c0_5 = arith.constant 0 : index
    %c0_6 = arith.constant 0 : index
    %6 = vector.load %arg3[%c0_5, %c0_6] : memref<1x128xf32, #tpu.memory_space<vmem>>, vector<1x128xf32>
    %7 = vector.broadcast %6 : vector<1x128xf32> to vector<2x128xf32>
    %8 = arith.addf %5, %7 : vector<2x128xf32>
    %9 = vector.broadcast %1 : f32 to vector<2x128xf32>
    %10 = arith.mulf %8, %9 : vector<2x128xf32>
    %c0_7 = arith.constant 0 : index
    %c0_8 = arith.constant 0 : index
    %11 = vector.load %arg5[%c0_7, %c0_8] : memref<2x128xf32, #tpu.memory_space<vmem>>, vector<2x128xf32>
    tpu.vector_store %arg5[%c0_7, %c0_8], %10 {strides = array<i32>} : memref<2x128xf32, #tpu.memory_space<vmem>>, vector<2x128xf32>,
    return
  }
  func.func @transform_0(%arg0: i32) -> (i32, i32) {
    %c0_i32 = arith.constant 0 : i32
    %c0_i32_0 = arith.constant 0 : i32
    return %arg0, %c0_i32 : i32, i32
  }
  func.func @transform_1(%arg0: i32) -> (i32, i32) {
    %c0_i32 = arith.constant 0 : i32
    %c0_i32_0 = arith.constant 0 : i32
    %c0_i32_1 = arith.constant 0 : i32
    return %c0_i32, %c0_i32_0 : i32, i32
  }
  func.func @transform_2(%arg0: i32) -> (i32, i32) {
    %c0_i32 = arith.constant 0 : i32
    %c0_i32_0 = arith.constant 0 : i32
    %c0_i32_1 = arith.constant 0 : i32
    return %c0_i32, %c0_i32_0 : i32, i32
  }
  func.func @transform_3(%arg0: i32) -> i32 {
    %c0_i32 = arith.constant 0 : i32
    %c0_i32_0 = arith.constant 0 : i32
    return %c0_i32 : i32
  }
  func.func @transform_4(%arg0: i32) -> (i32, i32) {
    %c0_i32 = arith.constant 0 : i32
    %c0_i32_0 = arith.constant 0 : i32
    return %arg0, %c0_i32 : i32, i32
  }
}

</mosaic_0001>

<llo_original>
// kernel: tpu_custom_call.1
$region0: #{tpu_custom_call.1}
  #allocation0 [shape = 'u32[]', space=smem, size = 0x4, offset = 0x4, fixed_abs, tag = 'smem constant byte address 0x4 - core index']
  #allocation1 [shape = 'u32[144,128]{1,0:T(1,128)}', space=vmem, size = 0x12000, scoped, tag = 'internal scratch']
  #allocation2 [shape = 'f32[1]{0:T(128)S(6)}', space=smem, size = 0x200, scoped, tag = 'scoped memory for tpu_custom_call.1']
  %s0 = inlined_call_operand.hbm [shape: f32[2,1024], index: 0, kind: input, shape index: {}]
  %s1 = inlined_call_operand.hbm [shape: bf16[1024,128], index: 1, kind: input, shape index: {}]
  %s2 = inlined_call_operand.vmem [shape: f32[1,128], index: 2, kind: input, shape index: {}]
  %s3 = inlined_call_operand.<no memory space> [shape: f32[1], index: 3, kind: input, shape index: {}]
  %s4 = inlined_call_operand.hbm [shape: f32[2,128], index: 4, kind: output, shape index: {}]
  %s5 = sld [smem:[#allocation0]]
  $region34: #{tpu_custom_call.1} parent=0
    _
  %s7 = ssub.s32 1, %s5
  %s8 = scalar_select 0, %s7, %s5
  %9 = sst [smem:[#allocation2]] %s3
  $region1: #{tpu_custom_call.1} parent=0
    #allocation3 [shape = 'u8[8192]{0}', space=vmem, size = 0x2000, scoped, tag = 'input window, operand 0, single buffered']
    #allocation4 [shape = 's32[1]{0}', space=sflag, size = 0x4, scoped, tag = 'scoped memory for tpu_custom_call.1']
    #allocation5 [shape = 's32[1]{0}', space=sflag, size = 0x4, scoped, tag = 'scoped memory for tpu_custom_call.1']
    #allocation6 [shape = 'u8[262144]{0}', space=vmem, size = 0x40000, scoped, tag = 'input window, operand 1, single buffered']
    #allocation7 [shape = 's32[1]{0}', space=sflag, size = 0x4, scoped, tag = 'scoped memory for tpu_custom_call.1']
    #allocation8 [shape = 'u8[1024]{0}', space=vmem, size = 0x400, scoped, tag = 'output window, operand 0, single buffered']
    %10 = vsyncpa [#allocation4], 0
    %11 = vsyncpa [#allocation7], 0
    %12 = vsyncpa [#allocation5], 0
    // Predicated region
    $region2: #{tpu_custom_call.1} parent=1 // pred_check
      _
    $region3: #{tpu_custom_call.1} parent=1 // pred_check_branch
      %14 = sbr.rel (0) target = $region5
    $region4: #{tpu_custom_call.1} parent=1 // pred_region
      %s16 = ssub.s32 256, 256
      %17 = vsyncadd [#allocation4], %s16
      %s19 = sshll.u32 [#allocation3], 4
      %s20 = int_to_ptr.vmem [resolvable:$true] %s19
      %22 = dma.hbm_to_vmem [thread:$0]  %s0, 256, %s20, [#allocation4]
    $region5: #{tpu_custom_call.1} parent=1 // pred_fallthru
      _
    // Predicated region
    $region6: #{tpu_custom_call.1} parent=1 // pred_check
      _
    $region7: #{tpu_custom_call.1} parent=1 // pred_check_branch
      %24 = sbr.rel (0) target = $region9
    $region8: #{tpu_custom_call.1} parent=1 // pred_region
      %s26 = ssub.s32 8192, 8192
      %27 = vsyncadd [#allocation7], %s26
      %s28 = sshll.u32 [#allocation6], 4
      %s29 = int_to_ptr.vmem [resolvable:$true] %s28
      %34 = dma.hbm_to_vmem [thread:$0]  %s1, 8192, %s29, [#allocation7], 64, 64, 4
    $region9: #{tpu_custom_call.1} parent=1 // pred_fallthru
      _
    // Predicated region
    $region10: #{tpu_custom_call.1} parent=1 // pred_check
      _
    $region11: #{tpu_custom_call.1} parent=1 // pred_check_branch
      %36 = sbr.rel (0) target = $region13
    $region12: #{tpu_custom_call.1} parent=1 // pred_region
      _
    $region13: #{tpu_custom_call.1} parent=1 // pred_fallthru
      _
    // Predicated region
    $region14: #{tpu_custom_call.1} parent=1 // pred_check
      _
    $region15: #{tpu_custom_call.1} parent=1 // pred_check_branch
      %38 = sbr.rel (0) target = $region17
    $region16: #{tpu_custom_call.1} parent=1 // pred_region
      _
    $region17: #{tpu_custom_call.1} parent=1 // pred_fallthru
      _
    // Predicated region
    $region18: #{tpu_custom_call.1} parent=1 // pred_check
      _
    $region19: #{tpu_custom_call.1} parent=1 // pred_check_branch
      %40 = sbr.rel (0) target = $region21
    $region20: #{tpu_custom_call.1} parent=1 // pred_region
      %41 = dma.done [#allocation4], 256
    $region21: #{tpu_custom_call.1} parent=1 // pred_fallthru
      _
    // Predicated region
    $region22: #{tpu_custom_call.1} parent=1 // pred_check
      _
    $region23: #{tpu_custom_call.1} parent=1 // pred_check_branch
      %43 = sbr.rel (0) target = $region25
    $region24: #{tpu_custom_call.1} parent=1 // pred_region
      %44 = dma.done [#allocation7], 8192
    $region25: #{tpu_custom_call.1} parent=1 // pred_fallthru
      _
    %s46 = sld [smem:[#allocation2]]
    %v47 = vstv %s46
    %v48 = vrcp.pop %v47
    %s49 = vtos %v48
    %v50 = vld [vmem:[#allocation3] sm:$0xff]
    %v51 = vld [vmem:[#allocation3 + $0x8] sm:$0xff]
    %v54 = vcombine.high %v50, %v50
    %v56 = vunpack.c.l.s4 1983009808
    %v57 = vunpack.c.0.s8 %v56
    %v58 = vlaneseq
    %v59 = vshrl.u32 %v58, 7
    %v60 = vsub.s32 %v57, %v59
    %v61 = vrot.slane %v50, %v60
    %v63 = vunpack.c.l.s4 1983009808
    %v64 = vunpack.c.0.s8 %v63
    %v65 = vlaneseq
    %v66 = vshrl.u32 %v65, 7
    %v67 = vsub.s32 %v64, %v66
    %v68 = vrot.slane %v54, %v67
    %v69 = vcombine.high %v61, %v61
    %v70 = vcombine.high %v68, %v68
    %v71 = vcombine.high %v51, %v51
    %v73 = vunpack.c.l.s4 1983009808
    %v74 = vunpack.c.0.s8 %v73
    %v75 = vlaneseq
    %v76 = vshrl.u32 %v75, 7
    %v77 = vsub.s32 %v74, %v76
    %v78 = vrot.slane %v51, %v77
    %v80 = vunpack.c.l.s4 1983009808
    %v81 = vunpack.c.0.s8 %v80
    %v82 = vlaneseq
    %v83 = vshrl.u32 %v82, 7
    %v84 = vsub.s32 %v81, %v83
    %v85 = vrot.slane %v71, %v84
    %v86 = vcombine.high %v78, %v78
    %v87 = vcombine.high %v85, %v85
    %v96 = vpack.c.bf16 %v61, %v61
    %v97 = vpack.c.bf16 %v69, %v69
    %v98 = vpack.c.bf16 %v68, %v68
    %v99 = vpack.c.bf16 %v70, %v70
    %v100 = vpack.c.bf16 %v78, %v78
    %v101 = vpack.c.bf16 %v86, %v86
    %v102 = vpack.c.bf16 %v85, %v85
    %v103 = vpack.c.bf16 %v87, %v87
    %v104 = vld [vmem:[#allocation6] sm:$0xf]
    %v105 = vld [vmem:[#allocation6 + $0x4] sm:$0xf]
    %v106 = vld [vmem:[#allocation6 + $0x8] sm:$0xf]
    %v107 = vld [vmem:[#allocation6 + $0xc] sm:$0xf]
    %v108 = vld [vmem:[#allocation6 + $0x10] sm:$0xf]
    %v109 = vld [vmem:[#allocation6 + $0x14] sm:$0xf]
    %v110 = vld [vmem:[#allocation6 + $0x18] sm:$0xf]
    %v111 = vld [vmem:[#allocation6 + $0x1c] sm:$0xf]
    %v112 = vld [vmem:[#allocation6 + $0x20] sm:$0xf]
    %v113 = vld [vmem:[#allocation6 + $0x24] sm:$0xf]
    %v114 = vld [vmem:[#allocation6 + $0x28] sm:$0xf]
    %v115 = vld [vmem:[#allocation6 + $0x2c] sm:$0xf]
    %v116 = vld [vmem:[#allocation6 + $0x30] sm:$0xf]
    %v117 = vld [vmem:[#allocation6 + $0x34] sm:$0xf]
    %v118 = vld [vmem:[#allocation6 + $0x38] sm:$0xf]
    %v119 = vld [vmem:[#allocation6 + $0x3c] sm:$0xf]
    %v120 = vld [vmem:[#allocation6 + $0x40] sm:$0xf]
    %v121 = vld [vmem:[#allocation6 + $0x44] sm:$0xf]
    %v122 = vld [vmem:[#allocation6 + $0x48] sm:$0xf]
    %v123 = vld [vmem:[#allocation6 + $0x4c] sm:$0xf]
    %v124 = vld [vmem:[#allocation6 + $0x50] sm:$0xf]
    %v125 = vld [vmem:[#allocation6 + $0x54] sm:$0xf]
    %v126 = vld [vmem:[#allocation6 + $0x58] sm:$0xf]
    %v127 = vld [vmem:[#allocation6 + $0x5c] sm:$0xf]
    %v128 = vld [vmem:[#allocation6 + $0x60] sm:$0xf]
    %v129 = vld [vmem:[#allocation6 + $0x64] sm:$0xf]
    %v130 = vld [vmem:[#allocation6 + $0x68] sm:$0xf]
    %v131 = vld [vmem:[#allocation6 + $0x6c] sm:$0xf]
    %v132 = vld [vmem:[#allocation6 + $0x70] sm:$0xf]
    %v133 = vld [vmem:[#allocation6 + $0x74] sm:$0xf]
    %v134 = vld [vmem:[#allocation6 + $0x78] sm:$0xf]
    %v135 = vld [vmem:[#allocation6 + $0x7c] sm:$0xf]
    %v136 = vld [vmem:[#allocation6 + $0x80] sm:$0xf]
    %v137 = vld [vmem:[#allocation6 + $0x84] sm:$0xf]
    %v138 = vld [vmem:[#allocation6 + $0x88] sm:$0xf]
    %v139 = vld [vmem:[#allocation6 + $0x8c] sm:$0xf]
    %v140 = vld [vmem:[#allocation6 + $0x90] sm:$0xf]
    %v141 = vld [vmem:[#allocation6 + $0x94] sm:$0xf]
    %v142 = vld [vmem:[#allocation6 + $0x98] sm:$0xf]
    %v143 = vld [vmem:[#allocation6 + $0x9c] sm:$0xf]
    %v144 = vld [vmem:[#allocation6 + $0xa0] sm:$0xf]
    %v145 = vld [vmem:[#allocation6 + $0xa4] sm:$0xf]
    %v146 = vld [vmem:[#allocation6 + $0xa8] sm:$0xf]
    %v147 = vld [vmem:[#allocation6 + $0xac] sm:$0xf]
    %v148 = vld [vmem:[#allocation6 + $0xb0] sm:$0xf]
    %v149 = vld [vmem:[#allocation6 + $0xb4] sm:$0xf]
    %v150 = vld [vmem:[#allocation6 + $0xb8] sm:$0xf]
    %v151 = vld [vmem:[#allocation6 + $0xbc] sm:$0xf]
    %v152 = vld [vmem:[#allocation6 + $0xc0] sm:$0xf]
    %v153 = vld [vmem:[#allocation6 + $0xc4] sm:$0xf]
    %v154 = vld [vmem:[#allocation6 + $0xc8] sm:$0xf]
    %v155 = vld [vmem:[#allocation6 + $0xcc] sm:$0xf]
    %v156 = vld [vmem:[#allocation6 + $0xd0] sm:$0xf]
    %v157 = vld [vmem:[#allocation6 + $0xd4] sm:$0xf]
    %v158 = vld [vmem:[#allocation6 + $0xd8] sm:$0xf]
    %v159 = vld [vmem:[#allocation6 + $0xdc] sm:$0xf]
    %v160 = vld [vmem:[#allocation6 + $0xe0] sm:$0xf]
    %v161 = vld [vmem:[#allocation6 + $0xe4] sm:$0xf]
    %v162 = vld [vmem:[#allocation6 + $0xe8] sm:$0xf]
    %v163 = vld [vmem:[#allocation6 + $0xec] sm:$0xf]
    %v164 = vld [vmem:[#allocation6 + $0xf0] sm:$0xf]
    %v165 = vld [vmem:[#allocation6 + $0xf4] sm:$0xf]
    %v166 = vld [vmem:[#allocation6 + $0xf8] sm:$0xf]
    %v167 = vld [vmem:[#allocation6 + $0xfc] sm:$0xf]
    %v168 = vld [vmem:[#allocation6 + $0x100] sm:$0xf]
    %v169 = vld [vmem:[#allocation6 + $0x104] sm:$0xf]
    %v170 = vld [vmem:[#allocation6 + $0x108] sm:$0xf]
    %v171 = vld [vmem:[#allocation6 + $0x10c] sm:$0xf]
    %v172 = vld [vmem:[#allocation6 + $0x110] sm:$0xf]
    %v173 = vld [vmem:[#allocation6 + $0x114] sm:$0xf]
    %v174 = vld [vmem:[#allocation6 + $0x118] sm:$0xf]
    %v175 = vld [vmem:[#allocation6 + $0x11c] sm:$0xf]
    %v176 = vld [vmem:[#allocation6 + $0x120] sm:$0xf]
    %v177 = vld [vmem:[#allocation6 + $0x124] sm:$0xf]
    %v178 = vld [vmem:[#allocation6 + $0x128] sm:$0xf]
    %v179 = vld [vmem:[#allocation6 + $0x12c] sm:$0xf]
    %v180 = vld [vmem:[#allocation6 + $0x130] sm:$0xf]
    %v181 = vld [vmem:[#allocation6 + $0x134] sm:$0xf]
    %v182 = vld [vmem:[#allocation6 + $0x138] sm:$0xf]
    %v183 = vld [vmem:[#allocation6 + $0x13c] sm:$0xf]
    %v184 = vld [vmem:[#allocation6 + $0x140] sm:$0xf]
    %v185 = vld [vmem:[#allocation6 + $0x144] sm:$0xf]
    %v186 = vld [vmem:[#allocation6 + $0x148] sm:$0xf]
    %v187 = vld [vmem:[#allocation6 + $0x14c] sm:$0xf]
    %v188 = vld [vmem:[#allocation6 + $0x150] sm:$0xf]
    %v189 = vld [vmem:[#allocation6 + $0x154] sm:$0xf]
    %v190 = vld [vmem:[#allocation6 + $0x158] sm:$0xf]
    %v191 = vld [vmem:[#allocation6 + $0x15c] sm:$0xf]
    %v192 = vld [vmem:[#allocation6 + $0x160] sm:$0xf]
    %v193 = vld [vmem:[#allocation6 + $0x164] sm:$0xf]
    %v194 = vld [vmem:[#allocation6 + $0x168] sm:$0xf]
    %v195 = vld [vmem:[#allocation6 + $0x16c] sm:$0xf]
    %v196 = vld [vmem:[#allocation6 + $0x170] sm:$0xf]
    %v197 = vld [vmem:[#allocation6 + $0x174] sm:$0xf]
    %v198 = vld [vmem:[#allocation6 + $0x178] sm:$0xf]
    %v199 = vld [vmem:[#allocation6 + $0x17c] sm:$0xf]
    %v200 = vld [vmem:[#allocation6 + $0x180] sm:$0xf]
    %v201 = vld [vmem:[#allocation6 + $0x184] sm:$0xf]
    %v202 = vld [vmem:[#allocation6 + $0x188] sm:$0xf]
    %v203 = vld [vmem:[#allocation6 + $0x18c] sm:$0xf]
    %v204 = vld [vmem:[#allocation6 + $0x190] sm:$0xf]
    %v205 = vld [vmem:[#allocation6 + $0x194] sm:$0xf]
    %v206 = vld [vmem:[#allocation6 + $0x198] sm:$0xf]
    %v207 = vld [vmem:[#allocation6 + $0x19c] sm:$0xf]
    %v208 = vld [vmem:[#allocation6 + $0x1a0] sm:$0xf]
    %v209 = vld [vmem:[#allocation6 + $0x1a4] sm:$0xf]
    %v210 = vld [vmem:[#allocation6 + $0x1a8] sm:$0xf]
    %v211 = vld [vmem:[#allocation6 + $0x1ac] sm:$0xf]
    %v212 = vld [vmem:[#allocation6 + $0x1b0] sm:$0xf]
    %v213 = vld [vmem:[#allocation6 + $0x1b4] sm:$0xf]
    %v214 = vld [vmem:[#allocation6 + $0x1b8] sm:$0xf]
    %v215 = vld [vmem:[#allocation6 + $0x1bc] sm:$0xf]
    %v216 = vld [vmem:[#allocation6 + $0x1c0] sm:$0xf]
    %v217 = vld [vmem:[#allocation6 + $0x1c4] sm:$0xf]
    %v218 = vld [vmem:[#allocation6 + $0x1c8] sm:$0xf]
    %v219 = vld [vmem:[#allocation6 + $0x1cc] sm:$0xf]
    %v220 = vld [vmem:[#allocation6 + $0x1d0] sm:$0xf]
    %v221 = vld [vmem:[#allocation6 + $0x1d4] sm:$0xf]
    %v222 = vld [vmem:[#allocation6 + $0x1d8] sm:$0xf]
    %v223 = vld [vmem:[#allocation6 + $0x1dc] sm:$0xf]
    %v224 = vld [vmem:[#allocation6 + $0x1e0] sm:$0xf]
    %v225 = vld [vmem:[#allocation6 + $0x1e4] sm:$0xf]
    %v226 = vld [vmem:[#allocation6 + $0x1e8] sm:$0xf]
    %v227 = vld [vmem:[#allocation6 + $0x1ec] sm:$0xf]
    %v228 = vld [vmem:[#allocation6 + $0x1f0] sm:$0xf]
    %v229 = vld [vmem:[#allocation6 + $0x1f4] sm:$0xf]
    %v230 = vld [vmem:[#allocation6 + $0x1f8] sm:$0xf]
    %v231 = vld [vmem:[#allocation6 + $0x1fc] sm:$0xf]
    %v232 = vld [vmem:[%s2] sm:$0x1]
    %v234 = vlaneseq
    %v235 = vshrl.u32 %v234, 7
    %v236 = vsub.s32 0, %v235
    %v237 = vrot.slane %v232, %v236
    %v367 = vunpack.c.l.b16 %v104
    %v368 = vunpack.c.l.b16 %v105
    %v369 = vunpack.c.l.b16 %v106
    %v370 = vunpack.c.l.b16 %v107
    %v371 = vunpack.c.l.b16 %v108
    %v372 = vunpack.c.l.b16 %v109
    %v373 = vunpack.c.l.b16 %v110
    %v374 = vunpack.c.l.b16 %v111
    %v375 = vunpack.c.l.b16 %v112
    %v376 = vunpack.c.l.b16 %v113
    %v377 = vunpack.c.l.b16 %v114
    %v378 = vunpack.c.l.b16 %v115
    %v379 = vunpack.c.l.b16 %v116
    %v380 = vunpack.c.l.b16 %v117
    %v381 = vunpack.c.l.b16 %v118
    %v382 = vunpack.c.l.b16 %v119
    %v383 = vunpack.c.l.b16 %v120
    %v384 = vunpack.c.l.b16 %v121
    %v385 = vunpack.c.l.b16 %v122
    %v386 = vunpack.c.l.b16 %v123
    %v387 = vunpack.c.l.b16 %v124
    %v388 = vunpack.c.l.b16 %v125
    %v389 = vunpack.c.l.b16 %v126
    %v390 = vunpack.c.l.b16 %v127
    %v391 = vunpack.c.l.b16 %v128
    %v392 = vunpack.c.l.b16 %v129
    %v393 = vunpack.c.l.b16 %v130
    %v394 = vunpack.c.l.b16 %v131
    %v395 = vunpack.c.l.b16 %v132
    %v396 = vunpack.c.l.b16 %v133
    %v397 = vunpack.c.l.b16 %v134
    %v398 = vunpack.c.l.b16 %v135
    %v399 = vunpack.c.l.b16 %v136
    %v400 = vunpack.c.l.b16 %v137
    %v401 = vunpack.c.l.b16 %v138
    %v402 = vunpack.c.l.b16 %v139
    %v403 = vunpack.c.l.b16 %v140
    %v404 = vunpack.c.l.b16 %v141
    %v405 = vunpack.c.l.b16 %v142
    %v406 = vunpack.c.l.b16 %v143
    %v407 = vunpack.c.l.b16 %v144
    %v408 = vunpack.c.l.b16 %v145
    %v409 = vunpack.c.l.b16 %v146
    %v410 = vunpack.c.l.b16 %v147
    %v411 = vunpack.c.l.b16 %v148
    %v412 = vunpack.c.l.b16 %v149
    %v413 = vunpack.c.l.b16 %v150
    %v414 = vunpack.c.l.b16 %v151
    %v415 = vunpack.c.l.b16 %v152
    %v416 = vunpack.c.l.b16 %v153
    %v417 = vunpack.c.l.b16 %v154
    %v418 = vunpack.c.l.b16 %v155
    %v419 = vunpack.c.l.b16 %v156
    %v420 = vunpack.c.l.b16 %v157
    %v421 = vunpack.c.l.b16 %v158
    %v422 = vunpack.c.l.b16 %v159
    %v423 = vunpack.c.l.b16 %v160
    %v424 = vunpack.c.l.b16 %v161
    %v425 = vunpack.c.l.b16 %v162
    %v426 = vunpack.c.l.b16 %v163
    %v427 = vunpack.c.l.b16 %v164
    %v428 = vunpack.c.l.b16 %v165
    %v429 = vunpack.c.l.b16 %v166
    %v430 = vunpack.c.l.b16 %v167
    %v431 = vunpack.c.l.b16 %v168
    %v432 = vunpack.c.l.b16 %v169
    %v433 = vunpack.c.l.b16 %v170
    %v434 = vunpack.c.l.b16 %v171
    %v435 = vunpack.c.l.b16 %v172
    %v436 = vunpack.c.l.b16 %v173
    %v437 = vunpack.c.l.b16 %v174
    %v438 = vunpack.c.l.b16 %v175
    %v439 = vunpack.c.l.b16 %v176
    %v440 = vunpack.c.l.b16 %v177
    %v441 = vunpack.c.l.b16 %v178
    %v442 = vunpack.c.l.b16 %v179
    %v443 = vunpack.c.l.b16 %v180
    %v444 = vunpack.c.l.b16 %v181
    %v445 = vunpack.c.l.b16 %v182
    %v446 = vunpack.c.l.b16 %v183
    %v447 = vunpack.c.l.b16 %v184
    %v448 = vunpack.c.l.b16 %v185
    %v449 = vunpack.c.l.b16 %v186
    %v450 = vunpack.c.l.b16 %v187
    %v451 = vunpack.c.l.b16 %v188
    %v452 = vunpack.c.l.b16 %v189
    %v453 = vunpack.c.l.b16 %v190
    %v454 = vunpack.c.l.b16 %v191
    %v455 = vunpack.c.l.b16 %v192
    %v456 = vunpack.c.l.b16 %v193
    %v457 = vunpack.c.l.b16 %v194
    %v458 = vunpack.c.l.b16 %v195
    %v459 = vunpack.c.l.b16 %v196
    %v460 = vunpack.c.l.b16 %v197
    %v461 = vunpack.c.l.b16 %v198
    %v462 = vunpack.c.l.b16 %v199
    %v463 = vunpack.c.l.b16 %v200
    %v464 = vunpack.c.l.b16 %v201
    %v465 = vunpack.c.l.b16 %v202
    %v466 = vunpack.c.l.b16 %v203
    %v467 = vunpack.c.l.b16 %v204
    %v468 = vunpack.c.l.b16 %v205
    %v469 = vunpack.c.l.b16 %v206
    %v470 = vunpack.c.l.b16 %v207
    %v471 = vunpack.c.l.b16 %v208
    %v472 = vunpack.c.l.b16 %v209
    %v473 = vunpack.c.l.b16 %v210
    %v474 = vunpack.c.l.b16 %v211
    %v475 = vunpack.c.l.b16 %v212
    %v476 = vunpack.c.l.b16 %v213
    %v477 = vunpack.c.l.b16 %v214
    %v478 = vunpack.c.l.b16 %v215
    %v479 = vunpack.c.l.b16 %v216
    %v480 = vunpack.c.l.b16 %v217
    %v481 = vunpack.c.l.b16 %v218
    %v482 = vunpack.c.l.b16 %v219
    %v483 = vunpack.c.l.b16 %v220
    %v484 = vunpack.c.l.b16 %v221
    %v485 = vunpack.c.l.b16 %v222
    %v486 = vunpack.c.l.b16 %v223
    %v487 = vunpack.c.l.b16 %v224
    %v488 = vunpack.c.l.b16 %v225
    %v489 = vunpack.c.l.b16 %v226
    %v490 = vunpack.c.l.b16 %v227
    %v491 = vunpack.c.l.b16 %v228
    %v492 = vunpack.c.l.b16 %v229
    %v493 = vunpack.c.l.b16 %v230
    %v494 = vunpack.c.l.b16 %v231
    %v495 = vpack.c.b16 %v368, %v367
    %v496 = vpack.c.b16 %v370, %v369
    %v497 = vpack.c.b16 %v372, %v371
    %v498 = vpack.c.b16 %v374, %v373
    %v499 = vpack.c.b16 %v376, %v375
    %v500 = vpack.c.b16 %v378, %v377
    %v501 = vpack.c.b16 %v380, %v379
    %v502 = vpack.c.b16 %v382, %v381
    %v503 = vpack.c.b16 %v384, %v383
    %v504 = vpack.c.b16 %v386, %v385
    %v505 = vpack.c.b16 %v388, %v387
    %v506 = vpack.c.b16 %v390, %v389
    %v507 = vpack.c.b16 %v392, %v391
    %v508 = vpack.c.b16 %v394, %v393
    %v509 = vpack.c.b16 %v396, %v395
    %v510 = vpack.c.b16 %v398, %v397
    %v511 = vpack.c.b16 %v400, %v399
    %v512 = vpack.c.b16 %v402, %v401
    %v513 = vpack.c.b16 %v404, %v403
    %v514 = vpack.c.b16 %v406, %v405
    %v515 = vpack.c.b16 %v408, %v407
    %v516 = vpack.c.b16 %v410, %v409
    %v517 = vpack.c.b16 %v412, %v411
    %v518 = vpack.c.b16 %v414, %v413
    %v519 = vpack.c.b16 %v416, %v415
    %v520 = vpack.c.b16 %v418, %v417
    %v521 = vpack.c.b16 %v420, %v419
    %v522 = vpack.c.b16 %v422, %v421
    %v523 = vpack.c.b16 %v424, %v423
    %v524 = vpack.c.b16 %v426, %v425
    %v525 = vpack.c.b16 %v428, %v427
    %v526 = vpack.c.b16 %v430, %v429
    %v527 = vpack.c.b16 %v432, %v431
    %v528 = vpack.c.b16 %v434, %v433
    %v529 = vpack.c.b16 %v436, %v435
    %v530 = vpack.c.b16 %v438, %v437
    %v531 = vpack.c.b16 %v440, %v439
    %v532 = vpack.c.b16 %v442, %v441
    %v533 = vpack.c.b16 %v444, %v443
    %v534 = vpack.c.b16 %v446, %v445
    %v535 = vpack.c.b16 %v448, %v447
    %v536 = vpack.c.b16 %v450, %v449
    %v537 = vpack.c.b16 %v452, %v451
    %v538 = vpack.c.b16 %v454, %v453
    %v539 = vpack.c.b16 %v456, %v455
    %v540 = vpack.c.b16 %v458, %v457
    %v541 = vpack.c.b16 %v460, %v459
    %v542 = vpack.c.b16 %v462, %v461
    %v543 = vpack.c.b16 %v464, %v463
    %v544 = vpack.c.b16 %v466, %v465
    %v545 = vpack.c.b16 %v468, %v467
    %v546 = vpack.c.b16 %v470, %v469
    %v547 = vpack.c.b16 %v472, %v471
    %v548 = vpack.c.b16 %v474, %v473
    %v549 = vpack.c.b16 %v476, %v475
    %v550 = vpack.c.b16 %v478, %v477
    %v551 = vpack.c.b16 %v480, %v479
    %v552 = vpack.c.b16 %v482, %v481
    %v553 = vpack.c.b16 %v484, %v483
    %v554 = vpack.c.b16 %v486, %v485
    %v555 = vpack.c.b16 %v488, %v487
    %v556 = vpack.c.b16 %v490, %v489
    %v557 = vpack.c.b16 %v492, %v491
    %v558 = vpack.c.b16 %v494, %v493
    %623 = vmatprep.subr.bf16.mxu0 0
    %624 = vmatpush1.bf16.msra.mxu0 %v495
    %625 = vmatprep.subr.bf16.mxu0 0
    %626 = vmatpush1.bf16.msra.mxu0 %v496
    %627 = vmatprep.subr.bf16.mxu0 0
    %628 = vmatpush1.bf16.msra.mxu0 %v497
    %629 = vmatprep.subr.bf16.mxu0 0
    %630 = vmatpush1.bf16.msra.mxu0 %v498
    %631 = vmatprep.subr.bf16.mxu0 0
    %632 = vmatpush1.bf16.msra.mxu0 %v499
    %633 = vmatprep.subr.bf16.mxu0 0
    %634 = vmatpush1.bf16.msra.mxu0 %v500
    %635 = vmatprep.subr.bf16.mxu0 0
    %636 = vmatpush1.bf16.msra.mxu0 %v501
    %637 = vmatprep.subr.bf16.mxu0 0
    %638 = vmatpush1.bf16.msra.mxu0 %v502
    %639 = vmatprep.subr.bf16.mxu0 0
    %640 = vmatpush1.bf16.msra.mxu0 %v503
    %641 = vmatprep.subr.bf16.mxu0 0
    %642 = vmatpush1.bf16.msra.mxu0 %v504
    %643 = vmatprep.subr.bf16.mxu0 0
    %644 = vmatpush1.bf16.msra.mxu0 %v505
    %645 = vmatprep.subr.bf16.mxu0 0
    %646 = vmatpush1.bf16.msra.mxu0 %v506
    %647 = vmatprep.subr.bf16.mxu0 0
    %648 = vmatpush1.bf16.msra.mxu0 %v507
    %649 = vmatprep.subr.bf16.mxu0 0
    %650 = vmatpush1.bf16.msra.mxu0 %v508
    %651 = vmatprep.subr.bf16.mxu0 0
    %652 = vmatpush1.bf16.msra.mxu0 %v509
    %653 = vmatprep.subr.bf16.mxu0 0
    %654 = vmatpush1.bf16.msra.mxu0 %v510
    %655 = vmatprep.mubr.bf16.mxu0 %v97
    %656 = vmatmul.mubr.bf16.gmra.mrb[0].mxu0 %v96
    %v657 = vpop.f32.mrb[0].mxu0
    %v658 = vadd.f32 %v237, %v657
    %v659 = vpop.f32.mrb[0].mxu0
    %v660 = vpop.f32.mrb[0].mxu0
    %v661 = vpop.f32.mrb[0].mxu0
    %662 = vdwg.mxu0
    %663 = vmatprep.subr.bf16.mxu0 0
    %664 = vmatpush1.bf16.msra.mxu0 %v511
    %665 = vmatprep.subr.bf16.mxu0 0
    %666 = vmatpush1.bf16.msra.mxu0 %v512
    %667 = vmatprep.subr.bf16.mxu0 0
    %668 = vmatpush1.bf16.msra.mxu0 %v513
    %669 = vmatprep.subr.bf16.mxu0 0
    %670 = vmatpush1.bf16.msra.mxu0 %v514
    %671 = vmatprep.subr.bf16.mxu0 0
    %672 = vmatpush1.bf16.msra.mxu0 %v515
    %673 = vmatprep.subr.bf16.mxu0 0
    %674 = vmatpush1.bf16.msra.mxu0 %v516
    %675 = vmatprep.subr.bf16.mxu0 0
    %676 = vmatpush1.bf16.msra.mxu0 %v517
    %677 = vmatprep.subr.bf16.mxu0 0
    %678 = vmatpush1.bf16.msra.mxu0 %v518
    %679 = vmatprep.subr.bf16.mxu0 0
    %680 = vmatpush1.bf16.msra.mxu0 %v519
    %681 = vmatprep.subr.bf16.mxu0 0
    %682 = vmatpush1.bf16.msra.mxu0 %v520
    %683 = vmatprep.subr.bf16.mxu0 0
    %684 = vmatpush1.bf16.msra.mxu0 %v521
    %685 = vmatprep.subr.bf16.mxu0 0
    %686 = vmatpush1.bf16.msra.mxu0 %v522
    %687 = vmatprep.subr.bf16.mxu0 0
    %688 = vmatpush1.bf16.msra.mxu0 %v523
    %689 = vmatprep.subr.bf16.mxu0 0
    %690 = vmatpush1.bf16.msra.mxu0 %v524
    %691 = vmatprep.subr.bf16.mxu0 0
    %692 = vmatpush1.bf16.msra.mxu0 %v525
    %693 = vmatprep.subr.bf16.mxu0 0
    %694 = vmatpush1.bf16.msra.mxu0 %v526
    %695 = vmatprep.mubr.bf16.mxu0 %v99
    %696 = vmatmul.mubr.bf16.gmra.mrb[0].mxu0 %v98
    %v697 = vpop.f32.mrb[0].mxu0
    %v698 = vadd.f32 %v658, %v697
    %v699 = vpop.f32.mrb[0].mxu0
    %v700 = vpop.f32.mrb[0].mxu0
    %v701 = vpop.f32.mrb[0].mxu0
    %702 = vdwg.mxu0
    %703 = vmatprep.subr.bf16.mxu0 0
    %704 = vmatpush1.bf16.msra.mxu0 %v527
    %705 = vmatprep.subr.bf16.mxu0 0
    %706 = vmatpush1.bf16.msra.mxu0 %v528
    %707 = vmatprep.subr.bf16.mxu0 0
    %708 = vmatpush1.bf16.msra.mxu0 %v529
    %709 = vmatprep.subr.bf16.mxu0 0
    %710 = vmatpush1.bf16.msra.mxu0 %v530
    %711 = vmatprep.subr.bf16.mxu0 0
    %712 = vmatpush1.bf16.msra.mxu0 %v531
    %713 = vmatprep.subr.bf16.mxu0 0
    %714 = vmatpush1.bf16.msra.mxu0 %v532
    %715 = vmatprep.subr.bf16.mxu0 0
    %716 = vmatpush1.bf16.msra.mxu0 %v533
    %717 = vmatprep.subr.bf16.mxu0 0
    %718 = vmatpush1.bf16.msra.mxu0 %v534
    %719 = vmatprep.subr.bf16.mxu0 0
    %720 = vmatpush1.bf16.msra.mxu0 %v535
    %721 = vmatprep.subr.bf16.mxu0 0
    %722 = vmatpush1.bf16.msra.mxu0 %v536
    %723 = vmatprep.subr.bf16.mxu0 0
    %724 = vmatpush1.bf16.msra.mxu0 %v537
    %725 = vmatprep.subr.bf16.mxu0 0
    %726 = vmatpush1.bf16.msra.mxu0 %v538
    %727 = vmatprep.subr.bf16.mxu0 0
    %728 = vmatpush1.bf16.msra.mxu0 %v539
    %729 = vmatprep.subr.bf16.mxu0 0
    %730 = vmatpush1.bf16.msra.mxu0 %v540
    %731 = vmatprep.subr.bf16.mxu0 0
    %732 = vmatpush1.bf16.msra.mxu0 %v541
    %733 = vmatprep.subr.bf16.mxu0 0
    %734 = vmatpush1.bf16.msra.mxu0 %v542
    %735 = vmatprep.mubr.bf16.mxu0 %v101
    %736 = vmatmul.mubr.bf16.gmra.mrb[0].mxu0 %v100
    %v737 = vpop.f32.mrb[0].mxu0
    %v738 = vadd.f32 %v698, %v737
    %v739 = vpop.f32.mrb[0].mxu0
    %v740 = vpop.f32.mrb[0].mxu0
    %v741 = vpop.f32.mrb[0].mxu0
    %742 = vdwg.mxu0
    %743 = vmatprep.subr.bf16.mxu0 0
    %744 = vmatpush1.bf16.msra.mxu0 %v543
    %745 = vmatprep.subr.bf16.mxu0 0
    %746 = vmatpush1.bf16.msra.mxu0 %v544
    %747 = vmatprep.subr.bf16.mxu0 0
    %748 = vmatpush1.bf16.msra.mxu0 %v545
    %749 = vmatprep.subr.bf16.mxu0 0
    %750 = vmatpush1.bf16.msra.mxu0 %v546
    %751 = vmatprep.subr.bf16.mxu0 0
    %752 = vmatpush1.bf16.msra.mxu0 %v547
    %753 = vmatprep.subr.bf16.mxu0 0
    %754 = vmatpush1.bf16.msra.mxu0 %v548
    %755 = vmatprep.subr.bf16.mxu0 0
    %756 = vmatpush1.bf16.msra.mxu0 %v549
    %757 = vmatprep.subr.bf16.mxu0 0
    %758 = vmatpush1.bf16.msra.mxu0 %v550
    %759 = vmatprep.subr.bf16.mxu0 0
    %760 = vmatpush1.bf16.msra.mxu0 %v551
    %761 = vmatprep.subr.bf16.mxu0 0
    %762 = vmatpush1.bf16.msra.mxu0 %v552
    %763 = vmatprep.subr.bf16.mxu0 0
    %764 = vmatpush1.bf16.msra.mxu0 %v553
    %765 = vmatprep.subr.bf16.mxu0 0
    %766 = vmatpush1.bf16.msra.mxu0 %v554
    %767 = vmatprep.subr.bf16.mxu0 0
    %768 = vmatpush1.bf16.msra.mxu0 %v555
    %769 = vmatprep.subr.bf16.mxu0 0
    %770 = vmatpush1.bf16.msra.mxu0 %v556
    %771 = vmatprep.subr.bf16.mxu0 0
    %772 = vmatpush1.bf16.msra.mxu0 %v557
    %773 = vmatprep.subr.bf16.mxu0 0
    %774 = vmatpush1.bf16.msra.mxu0 %v558
    %775 = vmatprep.mubr.bf16.mxu0 %v103
    %776 = vmatmul.mubr.bf16.gmra.mrb[0].mxu0 %v102
    %v777 = vpop.f32.mrb[0].mxu0
    %v778 = vadd.f32 %v738, %v777
    %v779 = vpop.f32.mrb[0].mxu0
    %v780 = vpop.f32.mrb[0].mxu0
    %v781 = vpop.f32.mrb[0].mxu0
    %782 = vdwg.mxu0
    %v783 = vstv %s49
    %v784 = vmul.f32 %v778, %v783
    %785 = vst [vmem:[#allocation8] sm:$0x3] %v784
    // Predicated region
    $region26: #{tpu_custom_call.1} parent=1 // pred_check
      _
    $region27: #{tpu_custom_call.1} parent=1 // pred_check_branch
      %787 = sbr.rel (0) target = $region29
    $region28: #{tpu_custom_call.1} parent=1 // pred_region
      %s789 = ssub.s32 32, 32
      %790 = vsyncadd [#allocation5], %s789
      %s792 = sshll.u32 [#allocation8], 4
      %s793 = int_to_ptr.vmem [resolvable:$true] %s792
      %795 = dma.vmem_to_hbm [thread:$0]  %s793, 32, %s4, [#allocation5]
    $region29: #{tpu_custom_call.1} parent=1 // pred_fallthru
      _
    // Predicated region
    $region30: #{tpu_custom_call.1} parent=1 // pred_check
      _
    $region31: #{tpu_custom_call.1} parent=1 // pred_check_branch
      %797 = sbr.rel (0) target = $region33
    $region32: #{tpu_custom_call.1} parent=1 // pred_region
      %798 = dma.done [#allocation5], 32
    $region33: #{tpu_custom_call.1} parent=1 // pred_fallthru
      _
    %799 = vsyncpa [#allocation4], 1
    %800 = vsyncpa [#allocation7], 1
    %801 = vsyncpa [#allocation5], 1

</llo_original>
